<compile_context>
chip_gen: v6e
topology: v6e:2x2x1
jax: 0.10.0
libtpu: 0.0.40
codegen_flags: <defaults>
</compile_context>

<pallas_src>
import math

import jax
import jax.numpy as jnp
from jax.experimental import pallas as pl
from jax.experimental.pallas import tpu as pltpu


# --------------------------------------------------------------------------
# Tiling / VMEM budgeting
# --------------------------------------------------------------------------
_VMEM_TILE_BUDGET = 12 << 20   # target per-step working set (inputs + outputs,
                               # double buffered); safe under v5e's 16 MiB
                               # default scoped VMEM and far under v7x's 64 MiB.
_MAX_TILE_B = 1024


def _pick_tile_b(B, D, itemsize):
    """Rows per grid step.

    Working set per step ~= 8 * tile_b * D * itemsize (2 inputs + 2 outputs,
    double buffered).  Sized against a fixed VMEM budget so large D shrinks
    the tile; rounded to the sublane packing (8 rows f32, 16 rows bf16); for
    B > 256 capped at ~B/2 so the "parallel" grid has >= 2 steps and both v7x
    TensorCores get work.
    """
    sub = 8 * max(1, 4 // itemsize)
    tb = _VMEM_TILE_BUDGET // (8 * D * itemsize)
    tb = min(max((tb // sub) * sub, sub), _MAX_TILE_B)
    if B > 256:
        half = -(-((B + 1) // 2) // sub) * sub      # round_up(ceil(B/2), sub)
        tb = min(tb, max(half, sub))
    if B <= tb:
        return B                                    # single full-extent block
    return tb


# --------------------------------------------------------------------------
# Pallas kernels
# --------------------------------------------------------------------------
def _shared_unit_kernel(cnn_ref, kg_ref, mix_ref, wk_ref, wc_ref,
                        out_cnn_ref, out_kg_ref):
    f32 = jnp.float32
    cnn = cnn_ref[...].astype(f32)                  # (TB, D)
    kg = kg_ref[...].astype(f32)                    # (TB, D)
    mix = mix_ref[...]                              # (8, D) f32: gates + biases

    gaa, gab, gba, gbb = mix[0:1], mix[1:2], mix[2:3], mix[3:4]   # (1, D)
    b_cnn, b_kg = mix[4:5], mix[5:6]

    # pre-mixing gates (VPU, broadcast over the batch tile)
    cnn_m = gaa * cnn + gab * kg                    # (TB, D)
    kg_m = gba * cnn + gbb * kg                     # (TB, D)

    # Per-row dot products on the (otherwise idle) MXU instead of 4 cross-lane
    # XLU reductions.  wk cols 0/1 hold w_aa/w_ba, wc cols 0/1 hold w_ab/w_bb,
    # remaining columns are zero.  f32 accumulation.
    sk = jnp.dot(kg_m, wk_ref[...], preferred_element_type=f32)   # (TB, 128)
    sc = jnp.dot(cnn_m, wc_ref[...], preferred_element_type=f32)  # (TB, 128)
    s_aa, s_ba = sk[:, 0:1], sk[:, 1:2]             # (TB, 1)
    s_ab, s_bb = sc[:, 0:1], sc[:, 1:2]

    # rank-1 identity: c_mat @ w == cnn_m*(kg_m.w); c_mat^T @ w == kg_m*(cnn_m.w)
    out_cnn_ref[...] = (cnn_m * s_aa + kg_m * s_ab + b_cnn).astype(out_cnn_ref.dtype)
    out_kg_ref[...] = (cnn_m * s_ba + kg_m * s_bb + b_kg).astype(out_kg_ref.dtype)


def _premix_kernel(cnn_ref, kg_ref, mix_ref, out_cnn_ref, out_kg_ref):
    f32 = jnp.float32
    cnn = cnn_ref[...].astype(f32)
    kg = kg_ref[...].astype(f32)
    mix = mix_ref[...]
    out_cnn_ref[...] = (mix[0:1] * cnn + mix[1:2] * kg).astype(out_cnn_ref.dtype)
    out_kg_ref[...] = (mix[2:3] * cnn + mix[3:4] * kg).astype(out_kg_ref.dtype)


# --------------------------------------------------------------------------
# Parameter packing (hoist out of the per-forward path)
# --------------------------------------------------------------------------
def prepare_shared_unit_params(params, D):
    """Pack the ten (D, 1) parameters into kernel-friendly f32 slabs.

    Call once per parameter update and reuse across forwards.
    """
    f32 = jnp.float32

    def row(x):
        return jnp.asarray(x, f32).reshape(1, D)

    def col(x):
        return jnp.asarray(x, f32).reshape(D, 1)

    pad_rows = jnp.zeros((2, D), f32)
    one, zero = jnp.ones((1, D), f32), jnp.zeros((1, D), f32)
    b_cnn, b_kg = row(params["d_cnn_bias"]), row(params["d_kg_bias"])

    mix = jnp.concatenate(
        [row(params["w_aa_"]), row(params["w_ab_"]),
         row(params["w_ba_"]), row(params["w_bb_"]),
         b_cnn, b_kg, pad_rows], axis=0)                          # (8, D)
    mix_id = jnp.concatenate([one, zero, zero, one, b_cnn, b_kg, pad_rows],
                             axis=0)                              # identity gates (-C)

    zcols = jnp.zeros((D, 126), f32)
    wk = jnp.concatenate([col(params["w_aa"]), col(params["w_ba"]), zcols], axis=1)
    wc = jnp.concatenate([col(params["w_ab"]), col(params["w_bb"]), zcols], axis=1)
    return {"mix": mix, "mix_id": mix_id, "wk": wk, "wc": wc}


# --------------------------------------------------------------------------
# Wrapper
# --------------------------------------------------------------------------
def _tiled_call(kernel, drug_cnn, drug_kg, param_ops):
    B, D = drug_cnn.shape
    dt = drug_cnn.dtype
    itemsize = jnp.dtype(dt).itemsize
    tile_b = _pick_tile_b(B, D, itemsize)
    grid = (pl.cdiv(B, tile_b),)

    batched = pl.BlockSpec((tile_b, D), lambda i: (i, 0))
    param_specs = [pl.BlockSpec(p.shape, lambda i: (0, 0)) for p in param_ops]

    # Explicit scoped-VMEM limit sized to the derived tile; capped below v7x's
    # 64 MiB physical VMEM.
    param_bytes = sum(math.prod(p.shape) * jnp.dtype(p.dtype).itemsize
                      for p in param_ops)
    ws = 8 * tile_b * D * itemsize + 2 * param_bytes + (2 << 20)
    vmem_limit = int(min(max(ws, 16 << 20), 48 << 20))

    return pl.pallas_call(
        kernel,
        out_shape=(jax.ShapeDtypeStruct((B, D), dt),
                   jax.ShapeDtypeStruct((B, D), dt)),
        grid=grid,
        in_specs=[batched, batched] + param_specs,
        out_specs=(batched, batched),
        compiler_params=pltpu.CompilerParams(
            dimension_semantics=("parallel",),
            vmem_limit_bytes=vmem_limit),
    )(drug_cnn, drug_kg, *param_ops)


def shared_unit_nl(drug_cnn, drug_kg, params=None, variant="KG-MTL", prepared=None):
    """Pallas implementation of Shared_Unit_NL.forward."""
    _, D = drug_cnn.shape
    if prepared is None:
        prepared = prepare_shared_unit_params(params, D)
    if variant == "KG-MTL":
        ops = (prepared["mix"], prepared["wk"], prepared["wc"])
        return _tiled_call(_shared_unit_kernel, drug_cnn, drug_kg, ops)
    if variant == "KG-MTL-L":
        return _tiled_call(_premix_kernel, drug_cnn, drug_kg, (prepared["mix"],))
    if variant == "KG-MTL-C":
        ops = (prepared["mix_id"], prepared["wk"], prepared["wc"])
        return _tiled_call(_shared_unit_kernel, drug_cnn, drug_kg, ops)
    raise ValueError(variant)


# --------------------------------------------------------------------------
# Pure-JAX reference (mirrors the PyTorch math)
# --------------------------------------------------------------------------
def ref_forward(drug_cnn, drug_kg, p, variant="KG-MTL"):
    D = drug_cnn.shape[1]
    if variant in ("KG-MTL", "KG-MTL-L"):
        cnn_ = p["w_aa_"].reshape(D) * drug_cnn + p["w_ab_"].reshape(D) * drug_kg
        kg_ = p["w_ba_"].reshape(D) * drug_cnn + p["w_bb_"].reshape(D) * drug_kg
        if variant == "KG-MTL-L":
            return cnn_, kg_
    else:
        cnn_, kg_ = drug_cnn, drug_kg
    c_mat = jnp.matmul(cnn_[:, :, None], kg_[:, None, :])        # (B, D, D)
    c_mat_t = jnp.transpose(c_mat, (0, 2, 1))
    cm = c_mat.reshape(-1, D)
    cmt = c_mat_t.reshape(-1, D)
    out_cnn = (cm @ p["w_aa"] + cmt @ p["w_ab"]).reshape(-1, D) + p["d_cnn_bias"].reshape(D)
    out_kg = (cm @ p["w_ba"] + cmt @ p["w_bb"]).reshape(-1, D) + p["d_kg_bias"].reshape(D)
    return out_cnn, out_kg


# --------------------------------------------------------------------------
# Deterministic parameter init (shapes from the module's __init__)
# --------------------------------------------------------------------------
def init_params(key, D):
    ks = jax.random.split(key, 10)

    def xavier_uniform(k):
        bound = (6.0 / (D + 1)) ** 0.5
        return jax.random.uniform(k, (D, 1), jnp.float32, -bound, bound)

    def xavier_normal(k):
        std = (2.0 / (D + 1)) ** 0.5
        return std * jax.random.normal(k, (D, 1), jnp.float32)

    return {
        "w_aa": xavier_uniform(ks[0]),
        "w_ab": xavier_normal(ks[1]),
        "w_ba": xavier_normal(ks[2]),
        "w_bb": xavier_normal(ks[3]),
        "d_cnn_bias": xavier_normal(ks[4]),
        "d_kg_bias": xavier_normal(ks[5]),
        "w_aa_": xavier_uniform(ks[6]),
        "w_ab_": xavier_uniform(ks[7]),
        "w_ba_": xavier_uniform(ks[8]),
        "w_bb_": xavier_uniform(ks[9]),
    }


if __name__ == "__main__":
    key = jax.random.PRNGKey(0)

    # f32 cases; the last one exercises a >= 2-step "parallel" grid (v7x split).
    for (B, D) in ((2, 128), (12, 256), (528, 128)):
        kx, kk, kp = jax.random.split(jax.random.fold_in(key, B * 1000 + D), 3)
        drug_cnn = jax.random.normal(kx, (B, D), jnp.float32)
        drug_kg = jax.random.normal(kk, (B, D), jnp.float32)
        params = init_params(kp, D)
        prepared = prepare_shared_unit_params(params, D)   # hoisted packing

        for variant in ("KG-MTL", "KG-MTL-L", "KG-MTL-C"):
            outs = shared_unit_nl(drug_cnn, drug_kg, variant=variant, prepared=prepared)
            outs = jax.block_until_ready(outs)
            refs = ref_forward(drug_cnn, drug_kg, params, variant=variant)
            for o, r in zip(outs, refs):
                assert o.shape == r.shape, (variant, o.shape, r.shape)
                if not bool(jnp.allclose(o, r, rtol=1e-4, atol=1e-4)):
                    raise AssertionError(f"mismatch in variant {variant} (B={B}, D={D})")

    # bf16 I/O smoke test (bf16 in/out, f32 accumulation inside the kernel).
    B, D = 16, 128
    kx, kk, kp = jax.random.split(jax.random.fold_in(key, 7), 3)
    cnn16 = jax.random.normal(kx, (B, D), jnp.float32).astype(jnp.bfloat16)
    kg16 = jax.random.normal(kk, (B, D), jnp.float32).astype(jnp.bfloat16)
    params = init_params(kp, D)
    prepared = prepare_shared_unit_params(params, D)
    outs = jax.block_until_ready(
        shared_unit_nl(cnn16, kg16, variant="KG-MTL", prepared=prepared))
    refs = ref_forward(cnn16.astype(jnp.float32), kg16.astype(jnp.float32), params)
    for o, r in zip(outs, refs):
        if not bool(jnp.allclose(o.astype(jnp.float32), r, rtol=5e-2, atol=5e-2)):
            raise AssertionError("bf16 mismatch")

    print("KERNEL_OK")
</pallas_src>

<mosaic_0001>
module attributes {stable_mosaic.version = 11 : i64} {
  func.func @_shared_unit_kernel(%arg0: i32, %arg1: memref<2x128xf32, #tpu.memory_space<vmem>>, %arg2: memref<2x128xf32, #tpu.memory_space<vmem>>, %arg3: memref<8x128xf32, #tpu.memory_space<vmem>>, %arg4: memref<128x128xf32, #tpu.memory_space<vmem>>, %arg5: memref<128x128xf32, #tpu.memory_space<vmem>>, %arg6: memref<2x128xf32, #tpu.memory_space<vmem>>, %arg7: memref<2x128xf32, #tpu.memory_space<vmem>>) attributes {dimension_semantics = [#tpu.dimension_semantics<parallel>], iteration_bounds = array<i64: 1>, scalar_prefetch = 0 : i64, scratch_operands = 0 : i64, tpu.core_type = #tpu.core_type<tc>, window_params = [{transform_indices = @transform_0, window_bounds = array<i64: 2, 128>}, {transform_indices = @transform_1, window_bounds = array<i64: 2, 128>}, {pipeline_mode = #tpu.pipeline_mode<synchronous>, transform_indices = @transform_2, window_bounds = array<i64: 8, 128>}, {pipeline_mode = #tpu.pipeline_mode<synchronous>, transform_indices = @transform_3, window_bounds = array<i64: 128, 128>}, {pipeline_mode = #tpu.pipeline_mode<synchronous>, transform_indices = @transform_4, window_bounds = array<i64: 128, 128>}, {transform_indices = @transform_5, window_bounds = array<i64: 2, 128>}, {transform_indices = @transform_6, window_bounds = array<i64: 2, 128>}]} {
    %c0 = arith.constant 0 : index
    %c0_0 = arith.constant 0 : index
    %0 = vector.load %arg1[%c0, %c0_0] : memref<2x128xf32, #tpu.memory_space<vmem>>, vector<2x128xf32>
    %c0_1 = arith.constant 0 : index
    %c0_2 = arith.constant 0 : index
    %1 = vector.load %arg2[%c0_1, %c0_2] : memref<2x128xf32, #tpu.memory_space<vmem>>, vector<2x128xf32>
    %c0_3 = arith.constant 0 : index
    %c0_4 = arith.constant 0 : index
    %2 = vector.load %arg3[%c0_3, %c0_4] : memref<8x128xf32, #tpu.memory_space<vmem>>, vector<8x128xf32>
    %3 = vector.extract_strided_slice %2 {offsets = [0, 0], sizes = [1, 128], strides = [1, 1]} : vector<8x128xf32> to vector<1x128xf32>
    %4 = vector.extract_strided_slice %2 {offsets = [1, 0], sizes = [1, 128], strides = [1, 1]} : vector<8x128xf32> to vector<1x128xf32>
    %5 = vector.extract_strided_slice %2 {offsets = [2, 0], sizes = [1, 128], strides = [1, 1]} : vector<8x128xf32> to vector<1x128xf32>
    %6 = vector.extract_strided_slice %2 {offsets = [3, 0], sizes = [1, 128], strides = [1, 1]} : vector<8x128xf32> to vector<1x128xf32>
    %7 = vector.extract_strided_slice %2 {offsets = [4, 0], sizes = [1, 128], strides = [1, 1]} : vector<8x128xf32> to vector<1x128xf32>
    %8 = vector.extract_strided_slice %2 {offsets = [5, 0], sizes = [1, 128], strides = [1, 1]} : vector<8x128xf32> to vector<1x128xf32>
    %9 = vector.broadcast %3 : vector<1x128xf32> to vector<2x128xf32>
    %10 = arith.mulf %9, %0 : vector<2x128xf32>
    %11 = vector.broadcast %4 : vector<1x128xf32> to vector<2x128xf32>
    %12 = arith.mulf %11, %1 : vector<2x128xf32>
    %13 = arith.addf %10, %12 : vector<2x128xf32>
    %14 = vector.broadcast %5 : vector<1x128xf32> to vector<2x128xf32>
    %15 = arith.mulf %14, %0 : vector<2x128xf32>
    %16 = vector.broadcast %6 : vector<1x128xf32> to vector<2x128xf32>
    %17 = arith.mulf %16, %1 : vector<2x128xf32>
    %18 = arith.addf %15, %17 : vector<2x128xf32>
    %c0_5 = arith.constant 0 : index
    %c0_6 = arith.constant 0 : index
    %19 = vector.load %arg4[%c0_5, %c0_6] : memref<128x128xf32, #tpu.memory_space<vmem>>, vector<128x128xf32>
    %cst = arith.constant dense<0.000000e+00> : vector<2x128xf32>
    %20 = tpu.matmul %18, %19, %cst {dimension_numbers = #tpu.dot_dimension_numbers<[1], [0], [0], [1], [0, 0, 1, 1], [], []>} : vector<2x128xf32>, vector<128x128xf32>, vector<2x128xf32> -> vector<2x128xf32>
    %c0_7 = arith.constant 0 : index
    %c0_8 = arith.constant 0 : index
    %21 = vector.load %arg5[%c0_7, %c0_8] : memref<128x128xf32, #tpu.memory_space<vmem>>, vector<128x128xf32>
    %cst_9 = arith.constant dense<0.000000e+00> : vector<2x128xf32>
    %22 = tpu.matmul %13, %21, %cst_9 {dimension_numbers = #tpu.dot_dimension_numbers<[1], [0], [0], [1], [0, 0, 1, 1], [], []>} : vector<2x128xf32>, vector<128x128xf32>, vector<2x128xf32> -> vector<2x128xf32>
    %23 = vector.extract_strided_slice %20 {offsets = [0, 0], sizes = [2, 1], strides = [1, 1]} : vector<2x128xf32> to vector<2x1xf32>
    %24 = vector.extract_strided_slice %20 {offsets = [0, 1], sizes = [2, 1], strides = [1, 1]} : vector<2x128xf32> to vector<2x1xf32>
    %25 = vector.extract_strided_slice %22 {offsets = [0, 0], sizes = [2, 1], strides = [1, 1]} : vector<2x128xf32> to vector<2x1xf32>
    %26 = vector.extract_strided_slice %22 {offsets = [0, 1], sizes = [2, 1], strides = [1, 1]} : vector<2x128xf32> to vector<2x1xf32>
    %27 = vector.broadcast %23 : vector<2x1xf32> to vector<2x128xf32>
    %28 = arith.mulf %13, %27 : vector<2x128xf32>
    %29 = vector.broadcast %25 : vector<2x1xf32> to vector<2x128xf32>
    %30 = arith.mulf %18, %29 : vector<2x128xf32>
    %31 = arith.addf %28, %30 : vector<2x128xf32>
    %32 = vector.broadcast %7 : vector<1x128xf32> to vector<2x128xf32>
    %33 = arith.addf %31, %32 : vector<2x128xf32>
    %c0_10 = arith.constant 0 : index
    %c0_11 = arith.constant 0 : index
    %34 = vector.load %arg6[%c0_10, %c0_11] : memref<2x128xf32, #tpu.memory_space<vmem>>, vector<2x128xf32>
    tpu.vector_store %arg6[%c0_10, %c0_11], %33 {strides = array<i32>} : memref<2x128xf32, #tpu.memory_space<vmem>>, vector<2x128xf32>,
    %35 = vector.broadcast %24 : vector<2x1xf32> to vector<2x128xf32>
    %36 = arith.mulf %13, %35 : vector<2x128xf32>
    %37 = vector.broadcast %26 : vector<2x1xf32> to vector<2x128xf32>
    %38 = arith.mulf %18, %37 : vector<2x128xf32>
    %39 = arith.addf %36, %38 : vector<2x128xf32>
    %40 = vector.broadcast %8 : vector<1x128xf32> to vector<2x128xf32>
    %41 = arith.addf %39, %40 : vector<2x128xf32>
    %c0_12 = arith.constant 0 : index
    %c0_13 = arith.constant 0 : index
    %42 = vector.load %arg7[%c0_12, %c0_13] : memref<2x128xf32, #tpu.memory_space<vmem>>, vector<2x128xf32>
    tpu.vector_store %arg7[%c0_12, %c0_13], %41 {strides = array<i32>} : memref<2x128xf32, #tpu.memory_space<vmem>>, vector<2x128xf32>,
    return
  }
  func.func @transform_0(%arg0: i32) -> (i32, i32) {
    %c0_i32 = arith.constant 0 : i32
    %c0_i32_0 = arith.constant 0 : i32
    return %arg0, %c0_i32 : i32, i32
  }
  func.func @transform_1(%arg0: i32) -> (i32, i32) {
    %c0_i32 = arith.constant 0 : i32
    %c0_i32_0 = arith.constant 0 : i32
    return %arg0, %c0_i32 : i32, i32
  }
  func.func @transform_2(%arg0: i32) -> (i32, i32) {
    %c0_i32 = arith.constant 0 : i32
    %c0_i32_0 = arith.constant 0 : i32
    %c0_i32_1 = arith.constant 0 : i32
    return %c0_i32, %c0_i32_0 : i32, i32
  }
  func.func @transform_3(%arg0: i32) -> (i32, i32) {
    %c0_i32 = arith.constant 0 : i32
    %c0_i32_0 = arith.constant 0 : i32
    %c0_i32_1 = arith.constant 0 : i32
    return %c0_i32, %c0_i32_0 : i32, i32
  }
  func.func @transform_4(%arg0: i32) -> (i32, i32) {
    %c0_i32 = arith.constant 0 : i32
    %c0_i32_0 = arith.constant 0 : i32
    %c0_i32_1 = arith.constant 0 : i32
    return %c0_i32, %c0_i32_0 : i32, i32
  }
  func.func @transform_5(%arg0: i32) -> (i32, i32) {
    %c0_i32 = arith.constant 0 : i32
    %c0_i32_0 = arith.constant 0 : i32
    return %arg0, %c0_i32 : i32, i32
  }
  func.func @transform_6(%arg0: i32) -> (i32, i32) {
    %c0_i32 = arith.constant 0 : i32
    %c0_i32_0 = arith.constant 0 : i32
    return %arg0, %c0_i32 : i32, i32
  }
}

</mosaic_0001>

<llo_original>
// kernel: tpu_custom_call.1
$region0: #{tpu_custom_call.1}
  #allocation0 [shape = 'u32[]', space=smem, size = 0x4, offset = 0x4, fixed_abs, tag = 'smem constant byte address 0x4 - core index']
  #allocation1 [shape = 'u32[144,128]{1,0:T(1,128)}', space=vmem, size = 0x12000, scoped, tag = 'internal scratch']
  %s0 = inlined_call_operand.hbm [shape: f32[2,128], index: 0, kind: input, shape index: {}]
  %s1 = inlined_call_operand.hbm [shape: f32[2,128], index: 1, kind: input, shape index: {}]
  %s2 = inlined_call_operand.hbm [shape: f32[8,128], index: 2, kind: input, shape index: {}]
  %s3 = inlined_call_operand.hbm [shape: f32[128,128], index: 3, kind: input, shape index: {}]
  %s4 = inlined_call_operand.hbm [shape: f32[128,128], index: 4, kind: input, shape index: {}]
  %s5 = inlined_call_operand.hbm [shape: f32[2,128], index: 5, kind: output, shape index: {0}]
  %s6 = inlined_call_operand.hbm [shape: f32[2,128], index: 6, kind: output, shape index: {1}]
  %7 = xla_tuple %s5, %s6
  %s8 = sld [smem:[#allocation0]]
  $region58: #{tpu_custom_call.1} parent=0
    _
  %s10 = ssub.s32 1, %s8
  %s11 = scalar_select 0, %s10, %s8
  $region1: #{tpu_custom_call.1} parent=0
    #allocation2 [shape = 'u8[1024]{0}', space=vmem, size = 0x400, scoped, tag = 'input window, operand 0, single buffered']
    #allocation3 [shape = 's32[1]{0}', space=sflag, size = 0x4, scoped, tag = 'scoped memory for tpu_custom_call.1']
    #allocation4 [shape = 's32[1]{0}', space=sflag, size = 0x4, scoped, tag = 'scoped memory for tpu_custom_call.1']
    #allocation5 [shape = 'u8[1024]{0}', space=vmem, size = 0x400, scoped, tag = 'input window, operand 1, single buffered']
    #allocation6 [shape = 's32[1]{0}', space=sflag, size = 0x4, scoped, tag = 'scoped memory for tpu_custom_call.1']
    #allocation7 [shape = 'u8[4096]{0}', space=vmem, size = 0x1000, scoped, tag = 'input window, operand 2, single buffered']
    #allocation8 [shape = 'u8[65536]{0}', space=vmem, size = 0x10000, scoped, tag = 'input window, operand 3, single buffered']
    #allocation9 [shape = 's32[1]{0}', space=sflag, size = 0x4, scoped, tag = 'scoped memory for tpu_custom_call.1']
    #allocation10 [shape = 'u8[65536]{0}', space=vmem, size = 0x10000, scoped, tag = 'input window, operand 4, single buffered']
    #allocation11 [shape = 'u8[1024]{0}', space=vmem, size = 0x400, scoped, tag = 'output window, operand 0, single buffered']
    #allocation12 [shape = 'u8[1024]{0}', space=vmem, size = 0x400, scoped, tag = 'output window, operand 1, single buffered']
    #allocation13 [shape = 's32[1]{0}', space=sflag, size = 0x4, scoped, tag = 'scoped memory for tpu_custom_call.1']
    %12 = vsyncpa [#allocation3], 0
    %13 = vsyncpa [#allocation6], 0
    %14 = vsyncpa [#allocation9], 0
    %15 = vsyncpa [#allocation4], 0
    %16 = vsyncpa [#allocation13], 0
    // Predicated region
    $region2: #{tpu_custom_call.1} parent=1 // pred_check
      _
    $region3: #{tpu_custom_call.1} parent=1 // pred_check_branch
      %18 = sbr.rel (0) target = $region5
    $region4: #{tpu_custom_call.1} parent=1 // pred_region
      %s20 = ssub.s32 32, 32
      %21 = vsyncadd [#allocation3], %s20
      %s23 = sshll.u32 [#allocation2], 4
      %s24 = int_to_ptr.vmem [resolvable:$true] %s23
      %26 = dma.hbm_to_vmem [thread:$0]  %s0, 32, %s24, [#allocation3]
    $region5: #{tpu_custom_call.1} parent=1 // pred_fallthru
      _
    // Predicated region
    $region6: #{tpu_custom_call.1} parent=1 // pred_check
      _
    $region7: #{tpu_custom_call.1} parent=1 // pred_check_branch
      %28 = sbr.rel (0) target = $region9
    $region8: #{tpu_custom_call.1} parent=1 // pred_region
      %s30 = ssub.s32 32, 32
      %31 = vsyncadd [#allocation6], %s30
      %s33 = sshll.u32 [#allocation5], 4
      %s34 = int_to_ptr.vmem [resolvable:$true] %s33
      %36 = dma.hbm_to_vmem [thread:$0]  %s1, 32, %s34, [#allocation6]
    $region9: #{tpu_custom_call.1} parent=1 // pred_fallthru
      _
    // Predicated region
    $region10: #{tpu_custom_call.1} parent=1 // pred_check
      _
    $region11: #{tpu_custom_call.1} parent=1 // pred_check_branch
      %38 = sbr.rel (0) target = $region13
    $region12: #{tpu_custom_call.1} parent=1 // pred_region
      %s40 = ssub.s32 128, 128
      %41 = vsyncadd [#allocation6], %s40
      %s43 = sshll.u32 [#allocation7], 4
      %s44 = int_to_ptr.vmem [resolvable:$true] %s43
      %46 = dma.hbm_to_vmem [thread:$0]  %s2, 128, %s44, [#allocation6]
    $region13: #{tpu_custom_call.1} parent=1 // pred_fallthru
      _
    // Predicated region
    $region14: #{tpu_custom_call.1} parent=1 // pred_check
      _
    $region15: #{tpu_custom_call.1} parent=1 // pred_check_branch
      %48 = sbr.rel (0) target = $region17
    $region16: #{tpu_custom_call.1} parent=1 // pred_region
      %s50 = ssub.s32 2048, 2048
      %51 = vsyncadd [#allocation9], %s50
      %s52 = sshll.u32 [#allocation8], 4
      %s53 = int_to_ptr.vmem [resolvable:$true] %s52
      %58 = dma.hbm_to_vmem [thread:$0]  %s3, 2048, %s53, [#allocation9], 128, 128, 8
    $region17: #{tpu_custom_call.1} parent=1 // pred_fallthru
      _
    // Predicated region
    $region18: #{tpu_custom_call.1} parent=1 // pred_check
      _
    $region19: #{tpu_custom_call.1} parent=1 // pred_check_branch
      %60 = sbr.rel (0) target = $region21
    $region20: #{tpu_custom_call.1} parent=1 // pred_region
      %s62 = ssub.s32 2048, 2048
      %63 = vsyncadd [#allocation9], %s62
      %s64 = sshll.u32 [#allocation10], 4
      %s65 = int_to_ptr.vmem [resolvable:$true] %s64
      %70 = dma.hbm_to_vmem [thread:$0]  %s4, 2048, %s65, [#allocation9], 128, 128, 8
    $region21: #{tpu_custom_call.1} parent=1 // pred_fallthru
      _
    // Predicated region
    $region22: #{tpu_custom_call.1} parent=1 // pred_check
      _
    $region23: #{tpu_custom_call.1} parent=1 // pred_check_branch
      %72 = sbr.rel (0) target = $region25
    $region24: #{tpu_custom_call.1} parent=1 // pred_region
      %73 = dma.done [#allocation3], 32
    $region25: #{tpu_custom_call.1} parent=1 // pred_fallthru
      _
    // Predicated region
    $region26: #{tpu_custom_call.1} parent=1 // pred_check
      _
    $region27: #{tpu_custom_call.1} parent=1 // pred_check_branch
      %75 = sbr.rel (0) target = $region29
    $region28: #{tpu_custom_call.1} parent=1 // pred_region
      %76 = dma.done [#allocation6], 32
    $region29: #{tpu_custom_call.1} parent=1 // pred_fallthru
      _
    // Predicated region
    $region30: #{tpu_custom_call.1} parent=1 // pred_check
      _
    $region31: #{tpu_custom_call.1} parent=1 // pred_check_branch
      %78 = sbr.rel (0) target = $region33
    $region32: #{tpu_custom_call.1} parent=1 // pred_region
      %79 = dma.done [#allocation6], 128
    $region33: #{tpu_custom_call.1} parent=1 // pred_fallthru
      _
    // Predicated region
    $region34: #{tpu_custom_call.1} parent=1 // pred_check
      _
    $region35: #{tpu_custom_call.1} parent=1 // pred_check_branch
      %81 = sbr.rel (0) target = $region37
    $region36: #{tpu_custom_call.1} parent=1 // pred_region
      %82 = dma.done [#allocation9], 2048
    $region37: #{tpu_custom_call.1} parent=1 // pred_fallthru
      _
    // Predicated region
    $region38: #{tpu_custom_call.1} parent=1 // pred_check
      _
    $region39: #{tpu_custom_call.1} parent=1 // pred_check_branch
      %84 = sbr.rel (0) target = $region41
    $region40: #{tpu_custom_call.1} parent=1 // pred_region
      %85 = dma.done [#allocation9], 2048
    $region41: #{tpu_custom_call.1} parent=1 // pred_fallthru
      _
    %v86 = vld [vmem:[#allocation2] sm:$0x3]
    %v87 = vld [vmem:[#allocation5] sm:$0x3]
    %v88 = vld [vmem:[#allocation7] sm:$0xff]
    %v89 = vlaneseq
    %v90 = vshrl.u32 %v89, 7
    %v91 = vsub.s32 0, %v90
    %v92 = vrot.slane %v88, %v91
    %v93 = vmul.f32 %v92, %v86
    %v94 = vlaneseq
    %v95 = vshrl.u32 %v94, 7
    %v96 = vsub.s32 1, %v95
    %v97 = vrot.slane %v88, %v96
    %v98 = vmul.f32 %v97, %v87
    %v99 = vadd.f32 %v93, %v98
    %v100 = vlaneseq
    %v101 = vshrl.u32 %v100, 7
    %v102 = vsub.s32 2, %v101
    %v103 = vrot.slane %v88, %v102
    %v104 = vmul.f32 %v103, %v86
    %v105 = vlaneseq
    %v106 = vshrl.u32 %v105, 7
    %v107 = vsub.s32 3, %v106
    %v108 = vrot.slane %v88, %v107
    %v109 = vmul.f32 %v108, %v87
    %v110 = vadd.f32 %v104, %v109
    %v111 = vld [vmem:[#allocation8] sm:$0xff]
    %v112 = vld [vmem:[#allocation8 + $0x8] sm:$0xff]
    %v113 = vld [vmem:[#allocation8 + $0x10] sm:$0xff]
    %v114 = vld [vmem:[#allocation8 + $0x18] sm:$0xff]
    %v115 = vld [vmem:[#allocation8 + $0x20] sm:$0xff]
    %v116 = vld [vmem:[#allocation8 + $0x28] sm:$0xff]
    %v117 = vld [vmem:[#allocation8 + $0x30] sm:$0xff]
    %v118 = vld [vmem:[#allocation8 + $0x38] sm:$0xff]
    %v119 = vld [vmem:[#allocation8 + $0x40] sm:$0xff]
    %v120 = vld [vmem:[#allocation8 + $0x48] sm:$0xff]
    %v121 = vld [vmem:[#allocation8 + $0x50] sm:$0xff]
    %v122 = vld [vmem:[#allocation8 + $0x58] sm:$0xff]
    %v123 = vld [vmem:[#allocation8 + $0x60] sm:$0xff]
    %v124 = vld [vmem:[#allocation8 + $0x68] sm:$0xff]
    %v125 = vld [vmem:[#allocation8 + $0x70] sm:$0xff]
    %v126 = vld [vmem:[#allocation8 + $0x78] sm:$0xff]
    %127 = vmatprep.subr.mxu0 0.0
    %128 = vmatpush1.msra.mxu0 %v126
    %129 = vmatprep.subr.mxu0 0.0
    %130 = vmatpush1.msra.mxu0 %v125
    %131 = vmatprep.subr.mxu0 0.0
    %132 = vmatpush1.msra.mxu0 %v124
    %133 = vmatprep.subr.mxu0 0.0
    %134 = vmatpush1.msra.mxu0 %v123
    %135 = vmatprep.subr.mxu0 0.0
    %136 = vmatpush1.msra.mxu0 %v122
    %137 = vmatprep.subr.mxu0 0.0
    %138 = vmatpush1.msra.mxu0 %v121
    %139 = vmatprep.subr.mxu0 0.0
    %140 = vmatpush1.msra.mxu0 %v120
    %141 = vmatprep.subr.mxu0 0.0
    %142 = vmatpush1.msra.mxu0 %v119
    %143 = vmatprep.subr.mxu0 0.0
    %144 = vmatpush1.msra.mxu0 %v118
    %145 = vmatprep.subr.mxu0 0.0
    %146 = vmatpush1.msra.mxu0 %v117
    %147 = vmatprep.subr.mxu0 0.0
    %148 = vmatpush1.msra.mxu0 %v116
    %149 = vmatprep.subr.mxu0 0.0
    %150 = vmatpush1.msra.mxu0 %v115
    %151 = vmatprep.subr.mxu0 0.0
    %152 = vmatpush1.msra.mxu0 %v114
    %153 = vmatprep.subr.mxu0 0.0
    %154 = vmatpush1.msra.mxu0 %v113
    %155 = vmatprep.subr.mxu0 0.0
    %156 = vmatpush1.msra.mxu0 %v112
    %157 = vmatprep.subr.mxu0 0.0
    %158 = vmatpush1.msra.mxu0 %v111
    %159 = vmatprep.subr.mxu0 0.0
    %160 = vmatpush2.msra.mxu0 0.0
    %161 = vmatprep.subr.mxu0 0.0
    %162 = vmatpush2.msra.mxu0 0.0
    %163 = vmatprep.subr.mxu0 0.0
    %164 = vmatpush2.msra.mxu0 0.0
    %165 = vmatprep.subr.mxu0 0.0
    %166 = vmatpush2.msra.mxu0 0.0
    %167 = vmatprep.subr.mxu0 0.0
    %168 = vmatpush2.msra.mxu0 0.0
    %169 = vmatprep.subr.mxu0 0.0
    %170 = vmatpush2.msra.mxu0 0.0
    %171 = vmatprep.subr.mxu0 0.0
    %172 = vmatpush2.msra.mxu0 0.0
    %173 = vmatprep.subr.mxu0 0.0
    %174 = vmatpush2.msra.mxu0 0.0
    %175 = vmatprep.subr.mxu0 0.0
    %176 = vmatpush2.msra.mxu0 0.0
    %177 = vmatprep.subr.mxu0 0.0
    %178 = vmatpush2.msra.mxu0 0.0
    %179 = vmatprep.subr.mxu0 0.0
    %180 = vmatpush2.msra.mxu0 0.0
    %181 = vmatprep.subr.mxu0 0.0
    %182 = vmatpush2.msra.mxu0 0.0
    %183 = vmatprep.subr.mxu0 0.0
    %184 = vmatpush2.msra.mxu0 0.0
    %185 = vmatprep.subr.mxu0 0.0
    %186 = vmatpush2.msra.mxu0 0.0
    %187 = vmatprep.subr.mxu0 0.0
    %188 = vmatpush2.msra.mxu0 0.0
    %189 = vmatprep.subr.mxu0 0.0
    %190 = vmatpush2.msra.mxu0 0.0
    %191 = vmatprep.mubr.f32.mxu0 0.0
    %192 = vmatmul.mubr.f32.gmra.mxu0 %v110
    %v193 = vpop.f32.mrf.mxu0
    %v194 = vadd.f32 0.0, %v193
    %v195 = vpop.f32.mrf.mxu0
    %196 = vdwg.mxu0
    %v197 = vld [vmem:[#allocation10] sm:$0xff]
    %v198 = vld [vmem:[#allocation10 + $0x8] sm:$0xff]
    %v199 = vld [vmem:[#allocation10 + $0x10] sm:$0xff]
    %v200 = vld [vmem:[#allocation10 + $0x18] sm:$0xff]
    %v201 = vld [vmem:[#allocation10 + $0x20] sm:$0xff]
    %v202 = vld [vmem:[#allocation10 + $0x28] sm:$0xff]
    %v203 = vld [vmem:[#allocation10 + $0x30] sm:$0xff]
    %v204 = vld [vmem:[#allocation10 + $0x38] sm:$0xff]
    %v205 = vld [vmem:[#allocation10 + $0x40] sm:$0xff]
    %v206 = vld [vmem:[#allocation10 + $0x48] sm:$0xff]
    %v207 = vld [vmem:[#allocation10 + $0x50] sm:$0xff]
    %v208 = vld [vmem:[#allocation10 + $0x58] sm:$0xff]
    %v209 = vld [vmem:[#allocation10 + $0x60] sm:$0xff]
    %v210 = vld [vmem:[#allocation10 + $0x68] sm:$0xff]
    %v211 = vld [vmem:[#allocation10 + $0x70] sm:$0xff]
    %v212 = vld [vmem:[#allocation10 + $0x78] sm:$0xff]
    %213 = vmatprep.subr.mxu0 0.0
    %214 = vmatpush1.msra.mxu0 %v212
    %215 = vmatprep.subr.mxu0 0.0
    %216 = vmatpush1.msra.mxu0 %v211
    %217 = vmatprep.subr.mxu0 0.0
    %218 = vmatpush1.msra.mxu0 %v210
    %219 = vmatprep.subr.mxu0 0.0
    %220 = vmatpush1.msra.mxu0 %v209
    %221 = vmatprep.subr.mxu0 0.0
    %222 = vmatpush1.msra.mxu0 %v208
    %223 = vmatprep.subr.mxu0 0.0
    %224 = vmatpush1.msra.mxu0 %v207
    %225 = vmatprep.subr.mxu0 0.0
    %226 = vmatpush1.msra.mxu0 %v206
    %227 = vmatprep.subr.mxu0 0.0
    %228 = vmatpush1.msra.mxu0 %v205
    %229 = vmatprep.subr.mxu0 0.0
    %230 = vmatpush1.msra.mxu0 %v204
    %231 = vmatprep.subr.mxu0 0.0
    %232 = vmatpush1.msra.mxu0 %v203
    %233 = vmatprep.subr.mxu0 0.0
    %234 = vmatpush1.msra.mxu0 %v202
    %235 = vmatprep.subr.mxu0 0.0
    %236 = vmatpush1.msra.mxu0 %v201
    %237 = vmatprep.subr.mxu0 0.0
    %238 = vmatpush1.msra.mxu0 %v200
    %239 = vmatprep.subr.mxu0 0.0
    %240 = vmatpush1.msra.mxu0 %v199
    %241 = vmatprep.subr.mxu0 0.0
    %242 = vmatpush1.msra.mxu0 %v198
    %243 = vmatprep.subr.mxu0 0.0
    %244 = vmatpush1.msra.mxu0 %v197
    %245 = vmatprep.subr.mxu0 0.0
    %246 = vmatpush2.msra.mxu0 0.0
    %247 = vmatprep.subr.mxu0 0.0
    %248 = vmatpush2.msra.mxu0 0.0
    %249 = vmatprep.subr.mxu0 0.0
    %250 = vmatpush2.msra.mxu0 0.0
    %251 = vmatprep.subr.mxu0 0.0
    %252 = vmatpush2.msra.mxu0 0.0
    %253 = vmatprep.subr.mxu0 0.0
    %254 = vmatpush2.msra.mxu0 0.0
    %255 = vmatprep.subr.mxu0 0.0
    %256 = vmatpush2.msra.mxu0 0.0
    %257 = vmatprep.subr.mxu0 0.0
    %258 = vmatpush2.msra.mxu0 0.0
    %259 = vmatprep.subr.mxu0 0.0
    %260 = vmatpush2.msra.mxu0 0.0
    %261 = vmatprep.subr.mxu0 0.0
    %262 = vmatpush2.msra.mxu0 0.0
    %263 = vmatprep.subr.mxu0 0.0
    %264 = vmatpush2.msra.mxu0 0.0
    %265 = vmatprep.subr.mxu0 0.0
    %266 = vmatpush2.msra.mxu0 0.0
    %267 = vmatprep.subr.mxu0 0.0
    %268 = vmatpush2.msra.mxu0 0.0
    %269 = vmatprep.subr.mxu0 0.0
    %270 = vmatpush2.msra.mxu0 0.0
    %271 = vmatprep.subr.mxu0 0.0
    %272 = vmatpush2.msra.mxu0 0.0
    %273 = vmatprep.subr.mxu0 0.0
    %274 = vmatpush2.msra.mxu0 0.0
    %275 = vmatprep.subr.mxu0 0.0
    %276 = vmatpush2.msra.mxu0 0.0
    %277 = vmatprep.mubr.f32.mxu0 0.0
    %278 = vmatmul.mubr.f32.gmra.mxu0 %v99
    %v279 = vpop.f32.mrf.mxu0
    %v280 = vadd.f32 0.0, %v279
    %v281 = vpop.f32.mrf.mxu0
    %282 = vdwg.mxu0
    %284 = vset.pattern.permute.xlu0 0
    %285 = vperm.xlu0 %284, %v194
    %v286 = vpop.permute.xlu0 %285
    %v288 = vmul.f32 %v99, %v286
    %290 = vset.pattern.permute.xlu0 0
    %291 = vperm.xlu0 %290, %v280
    %v292 = vpop.permute.xlu0 %291
    %v294 = vmul.f32 %v110, %v292
    %v295 = vadd.f32 %v288, %v294
    %v296 = vlaneseq
    %v297 = vshrl.u32 %v296, 7
    %v298 = vsub.s32 4, %v297
    %v299 = vrot.slane %v88, %v298
    %v300 = vadd.f32 %v295, %v299
    %301 = vst [vmem:[#allocation11] sm:$0x3] %v300
    %302 = vset.pattern.permute.xlu0 1
    %303 = vperm.xlu0 %302, %v194
    %v304 = vpop.permute.xlu0 %303
    %v306 = vmul.f32 %v99, %v304
    %307 = vset.pattern.permute.xlu0 1
    %308 = vperm.xlu0 %307, %v280
    %v309 = vpop.permute.xlu0 %308
    %v311 = vmul.f32 %v110, %v309
    %v312 = vadd.f32 %v306, %v311
    %v313 = vlaneseq
    %v314 = vshrl.u32 %v313, 7
    %v315 = vsub.s32 5, %v314
    %v316 = vrot.slane %v88, %v315
    %v317 = vadd.f32 %v312, %v316
    %318 = vst [vmem:[#allocation12] sm:$0x3] %v317
    // Predicated region
    $region42: #{tpu_custom_call.1} parent=1 // pred_check
      _
    $region43: #{tpu_custom_call.1} parent=1 // pred_check_branch
      %320 = sbr.rel (0) target = $region45
    $region44: #{tpu_custom_call.1} parent=1 // pred_region
      %s322 = ssub.s32 32, 32
      %323 = vsyncadd [#allocation4], %s322
      %s325 = sshll.u32 [#allocation11], 4
      %s326 = int_to_ptr.vmem [resolvable:$true] %s325
      %328 = dma.vmem_to_hbm [thread:$0]  %s326, 32, %s5, [#allocation4]
    $region45: #{tpu_custom_call.1} parent=1 // pred_fallthru
      _
    // Predicated region
    $region46: #{tpu_custom_call.1} parent=1 // pred_check
      _
    $region47: #{tpu_custom_call.1} parent=1 // pred_check_branch
      %330 = sbr.rel (0) target = $region49
    $region48: #{tpu_custom_call.1} parent=1 // pred_region
      %s332 = ssub.s32 32, 32
      %333 = vsyncadd [#allocation13], %s332
      %s335 = sshll.u32 [#allocation12], 4
      %s336 = int_to_ptr.vmem [resolvable:$true] %s335
      %338 = dma.vmem_to_hbm [thread:$0]  %s336, 32, %s6, [#allocation13]
    $region49: #{tpu_custom_call.1} parent=1 // pred_fallthru
      _
    // Predicated region
    $region50: #{tpu_custom_call.1} parent=1 // pred_check
      _
    $region51: #{tpu_custom_call.1} parent=1 // pred_check_branch
      %340 = sbr.rel (0) target = $region53
    $region52: #{tpu_custom_call.1} parent=1 // pred_region
      %341 = dma.done [#allocation4], 32
    $region53: #{tpu_custom_call.1} parent=1 // pred_fallthru
      _
    // Predicated region
    $region54: #{tpu_custom_call.1} parent=1 // pred_check
      _
    $region55: #{tpu_custom_call.1} parent=1 // pred_check_branch
      %343 = sbr.rel (0) target = $region57
    $region56: #{tpu_custom_call.1} parent=1 // pred_region
      %344 = dma.done [#allocation13], 32
    $region57: #{tpu_custom_call.1} parent=1 // pred_fallthru
      _
    %345 = vsyncpa [#allocation3], 1
    %346 = vsyncpa [#allocation6], 1
    %347 = vsyncpa [#allocation9], 1
    %348 = vsyncpa [#allocation4], 1
    %349 = vsyncpa [#allocation13], 1

</llo_original>
